<compile_context>
chip_gen: v7x
topology: tpu7x:2x2x1
jax: 0.10.0
libtpu: 0.0.40
codegen_flags: <defaults>
</compile_context>

<pallas_src>
import functools

import jax
import jax.numpy as jnp
from jax.experimental import pallas as pl
from jax.experimental.pallas import tpu as pltpu


_TM_CAP = 512  # max rows per block; keeps x slabs modest on every generation


def _round_up(x, m):
    return ((x + m - 1) // m) * m


def _cdiv(a, b):
    return -(-a // b)


def _vmem_capacity_bytes():
    """Per-core VMEM capacity (generation-aware); conservative fallback."""
    try:
        cap = int(getattr(pltpu.get_tpu_info(), "vmem_capacity_bytes", 0))
        if cap > 0:
            return cap
    except Exception:
        pass
    return 64 * 1024 * 1024  # safe on v5e / v6e / v7x


def _vmem_budgets():
    cap = _vmem_capacity_bytes()
    # ~3/4 of physical per-core VMEM, never above 100 MiB:
    #   v7x (64 MiB/TC) -> 48 MiB scoped limit;  v5e/v6e (128 MiB) -> 96 MiB.
    limit = min((cap * 3) // 4, 100 * 1024 * 1024)
    budget = (limit * 7) // 8  # headroom for Mosaic internal scratch
    return budget, limit


# --------------------------------------------------------------------------
# Kernels
# --------------------------------------------------------------------------
def _ease_fullk_kernel(x_ref, w_ref, d_ref, o_ref, *, tn):
    """Full-K path: one MXU pass per output tile, no accumulator scratch."""
    j = pl.program_id(0)  # column-block index (leading grid axis)
    acc = jnp.dot(x_ref[...], w_ref[...], preferred_element_type=jnp.float32)
    # Exact zero-diagonal fixup: x @ (W - diag(W)) == x @ W - x ⊙ diag(W).
    # Fixup columns are sliced from the already-resident x row slab (no extra
    # HBM pass over x).
    col0 = pl.multiple_of(j * tn, 128)
    xcols = x_ref[:, pl.ds(col0, tn)]
    acc = acc - xcols.astype(jnp.float32) * d_ref[...]
    o_ref[...] = acc.astype(o_ref.dtype)


def _ease_tiled_kernel(x_ref, w_ref, xcol_ref, d_ref, o_ref, acc_ref):
    """Tiled-K fallback (very large item counts): MXU feed + epilogue fixup."""
    k = pl.program_id(2)

    @pl.when(k == 0)
    def _():
        acc_ref[...] = jnp.zeros_like(acc_ref)

    acc_ref[...] += jnp.dot(x_ref[...], w_ref[...],
                            preferred_element_type=jnp.float32)

    @pl.when(k == pl.num_programs(2) - 1)
    def _():
        fixed = acc_ref[...] - xcol_ref[...].astype(jnp.float32) * d_ref[...]
        o_ref[...] = fixed.astype(o_ref.dtype)


# --------------------------------------------------------------------------
# Wrappers
# --------------------------------------------------------------------------
def prepare_ease_weights(w, matmul_dtype=jnp.bfloat16):
    """One-time weight prep (EASE W is fixed at inference): cast, pad, diag.

    Hoisted out of the per-call hot path so the full IxI W is not re-read and
    re-written in HBM on every forward call.
    """
    I = w.shape[0]
    assert w.shape == (I, I)
    Ip = _round_up(I, 128)
    if matmul_dtype is not None and w.dtype != matmul_dtype:
        w = w.astype(matmul_dtype)
    if Ip != I:
        w = jnp.pad(w, ((0, Ip - I), (0, Ip - I)))
    # Diagonal of the W actually fed to the MXU, kept in f32, so the epilogue
    # removes exactly the diagonal contribution the matmul added.
    diag = jnp.diagonal(w).astype(jnp.float32).reshape(1, Ip)
    return w, diag


def ease_forward(x, w_prepared, diag, *, matmul_dtype=jnp.bfloat16):
    """pred = x @ (W with zero diagonal), using prepared (padded) weights."""
    B, I = x.shape
    Ip = w_prepared.shape[0]
    out_dtype = x.dtype

    if matmul_dtype is not None and x.dtype != matmul_dtype:
        x = x.astype(matmul_dtype)  # 0/1 interactions are exact in bf16
    if Ip != I:
        x = jnp.pad(x, ((0, 0), (0, Ip - I)))

    # Balanced row blocking: minimizes zero-padding waste for B just above cap.
    n_row = _cdiv(B, _TM_CAP)
    tm = _round_up(_cdiv(B, n_row), 8)
    Bp = n_row * tm
    if Bp != B:
        x = jnp.pad(x, ((0, Bp - B), (0, 0)))

    x_size = jnp.dtype(x.dtype).itemsize
    w_size = jnp.dtype(w_prepared.dtype).itemsize
    o_size = jnp.dtype(out_dtype).itemsize
    budget, vmem_limit = _vmem_budgets()

    def fullk_bytes(tn_):
        return (2 * tm * Ip * x_size        # x row slab (double-buffered)
                + 2 * Ip * tn_ * w_size     # W column slab (resident over rows)
                + 2 * tn_ * 4               # diag(W) slice (f32)
                + 2 * tm * tn_ * o_size)    # output tile

    # Prefer the full-K path: no accumulator, no reduction axis, W read once.
    tn = 0
    for cand in range(min(Ip, 2048), 127, -128):
        if Ip % cand == 0 and fullk_bytes(cand) <= budget:
            tn = cand
            break

    if tn:
        # Keep >= 2 column blocks when possible so v7x megacore shards the
        # leading (column) axis: each TensorCore streams only half of W.
        if Ip // tn == 1 and tn >= 256 and (tn // 2) % 128 == 0:
            tn //= 2
        n_col = Ip // tn
        out = pl.pallas_call(
            functools.partial(_ease_fullk_kernel, tn=tn),
            out_shape=jax.ShapeDtypeStruct((Bp, Ip), out_dtype),
            grid_spec=pltpu.PrefetchScalarGridSpec(
                num_scalar_prefetch=0,
                # Column axis leading, row axis innermost: the (Ip, tn) W slab
                # is resident across the inner row loop, so W (the dominant
                # I^2 HBM traffic) streams exactly once per call.
                grid=(n_col, n_row),
                in_specs=[
                    pl.BlockSpec((tm, Ip), lambda j, i: (i, 0)),   # x row slab
                    pl.BlockSpec((Ip, tn), lambda j, i: (0, j)),   # W col slab
                    pl.BlockSpec((1, tn), lambda j, i: (0, j)),    # diag(W)
                ],
                out_specs=pl.BlockSpec((tm, tn), lambda j, i: (i, j)),
            ),
            compiler_params=pltpu.CompilerParams(
                dimension_semantics=("parallel", "parallel"),
                vmem_limit_bytes=vmem_limit,
            ),
        )(x, w_prepared, diag)
    else:
        # Very large item axis: tiled reduction with an f32 accumulator.
        def tiled_bytes(tn_, tk_):
            return (2 * tm * tk_ * x_size + 2 * tk_ * tn_ * w_size
                    + 2 * tm * tn_ * x_size + 2 * tn_ * 4
                    + 2 * tm * tn_ * o_size + tm * tn_ * 4)

        tn = 128
        for cand in range(min(Ip, 1024), 127, -128):
            if Ip % cand == 0 and tiled_bytes(cand, 128) <= budget:
                tn = cand
                break
        tk = 128
        for cand in range(min(Ip, 2048), 127, -128):
            if Ip % cand == 0 and tiled_bytes(tn, cand) <= budget:
                tk = cand
                break
        out = pl.pallas_call(
            _ease_tiled_kernel,
            out_shape=jax.ShapeDtypeStruct((Bp, Ip), out_dtype),
            grid_spec=pltpu.PrefetchScalarGridSpec(
                num_scalar_prefetch=0,
                grid=(Ip // tn, Bp // tm, Ip // tk),
                in_specs=[
                    pl.BlockSpec((tm, tk), lambda j, i, k: (i, k)),  # x tile
                    pl.BlockSpec((tk, tn), lambda j, i, k: (k, j)),  # W tile
                    pl.BlockSpec((tm, tn), lambda j, i, k: (i, j)),  # x fixup cols
                    pl.BlockSpec((1, tn), lambda j, i, k: (0, j)),   # diag(W)
                ],
                out_specs=pl.BlockSpec((tm, tn), lambda j, i, k: (i, j)),
                scratch_shapes=[pltpu.VMEM((tm, tn), jnp.float32)],
            ),
            compiler_params=pltpu.CompilerParams(
                dimension_semantics=("parallel", "parallel", "arbitrary"),
                vmem_limit_bytes=vmem_limit,
            ),
        )(x, w_prepared, x, diag)

    return out[:B, :I]


def aritem_forward(x, w, *, matmul_dtype=jnp.bfloat16):
    """ARItem.forward(x) == EASE(x) == x @ (W with its diagonal zeroed).

    Convenience wrapper; production inference should call
    prepare_ease_weights() once and reuse the prepared weights across batches.
    """
    w_prepared, diag = prepare_ease_weights(w, matmul_dtype=matmul_dtype)
    return ease_forward(x, w_prepared, diag, matmul_dtype=matmul_dtype)


if __name__ == "__main__":
    # Small synthetic shapes consistent with the module: i_num items, B users.
    i_num = 256
    batch = 16

    key = jax.random.PRNGKey(0)
    kx, kw = jax.random.split(key)

    # Binary user-item interaction matrix (dense), float32.
    x = (jax.random.uniform(kx, (batch, i_num)) < 0.1).astype(jnp.float32)
    # EASE item-item weight matrix.  Values are snapped to bf16-representable
    # numbers so both the default bf16-MXU path and the exact f32 path can be
    # validated against the same tight-tolerance f32 reference.
    w = jax.random.normal(kw, (i_num, i_num), dtype=jnp.float32) * 0.02
    w = w.astype(jnp.bfloat16).astype(jnp.float32)

    # Pure-JAX reference: x @ (W with zero diagonal).
    w_masked = w * (1.0 - jnp.eye(i_num, dtype=w.dtype))
    ref = jnp.dot(x, w_masked, precision=jax.lax.Precision.HIGHEST)

    out_bf16 = jax.block_until_ready(aritem_forward(x, w))                    # default bf16 MXU
    out_f32 = jax.block_until_ready(aritem_forward(x, w, matmul_dtype=None))  # exact f32

    assert out_bf16.shape == (batch, i_num) and out_bf16.dtype == x.dtype
    assert jnp.allclose(out_f32, ref, atol=1e-4, rtol=1e-4), "f32 path mismatch"
    assert jnp.allclose(out_bf16, ref, atol=1e-4, rtol=1e-4), "bf16 path mismatch"

    print("KERNEL_OK")
</pallas_src>

<mosaic_0001>
module attributes {stable_mosaic.version = 11 : i64} {
  func.func @_ease_fullk_kernel(%arg0: i32, %arg1: i32, %arg2: memref<16x256xbf16, #tpu.memory_space<vmem>>, %arg3: memref<256x128xbf16, #tpu.memory_space<vmem>>, %arg4: memref<1x128xf32, #tpu.memory_space<vmem>>, %arg5: memref<16x128xf32, #tpu.memory_space<vmem>>) attributes {dimension_semantics = [#tpu.dimension_semantics<parallel>, #tpu.dimension_semantics<parallel>], iteration_bounds = array<i64: 2, 1>, scalar_prefetch = 0 : i64, scratch_operands = 0 : i64, tpu.core_type = #tpu.core_type<tc>, window_params = [{transform_indices = @transform_0, window_bounds = array<i64: 16, 256>}, {transform_indices = @transform_1, window_bounds = array<i64: 256, 128>}, {transform_indices = @transform_2, window_bounds = array<i64: 1, 128>}, {transform_indices = @transform_3, window_bounds = array<i64: 16, 128>}]} {
    %c0 = arith.constant 0 : index
    %c0_0 = arith.constant 0 : index
    %0 = vector.load %arg2[%c0, %c0_0] : memref<16x256xbf16, #tpu.memory_space<vmem>>, vector<16x256xbf16>
    %c0_1 = arith.constant 0 : index
    %c0_2 = arith.constant 0 : index
    %1 = vector.load %arg3[%c0_1, %c0_2] : memref<256x128xbf16, #tpu.memory_space<vmem>>, vector<256x128xbf16>
    %cst = arith.constant dense<0.000000e+00> : vector<16x128xf32>
    %2 = tpu.matmul %0, %1, %cst {dimension_numbers = #tpu.dot_dimension_numbers<[1], [0], [0], [1], [0, 0, 1, 1], [], []>} : vector<16x256xbf16>, vector<256x128xbf16>, vector<16x128xf32> -> vector<16x128xf32>
    %c128_i32 = arith.constant 128 : i32
    %3 = arith.muli %arg0, %c128_i32 : i32
    %4 = tpu.assume_multiple %3, 128 : i32
    %c0_3 = arith.constant 0 : index
    %5 = arith.index_cast %4 : i32 to index
    %6 = vector.load %arg2[%c0_3, %5] : memref<16x256xbf16, #tpu.memory_space<vmem>>, vector<16x128xbf16>
    %7 = arith.extf %6 : vector<16x128xbf16> to vector<16x128xf32>
    %c0_4 = arith.constant 0 : index
    %c0_5 = arith.constant 0 : index
    %8 = vector.load %arg4[%c0_4, %c0_5] : memref<1x128xf32, #tpu.memory_space<vmem>>, vector<1x128xf32>
    %9 = vector.broadcast %8 : vector<1x128xf32> to vector<16x128xf32>
    %10 = arith.mulf %7, %9 : vector<16x128xf32>
    %11 = arith.subf %2, %10 : vector<16x128xf32>
    %c0_6 = arith.constant 0 : index
    %c0_7 = arith.constant 0 : index
    %12 = vector.load %arg5[%c0_6, %c0_7] : memref<16x128xf32, #tpu.memory_space<vmem>>, vector<16x128xf32>
    tpu.vector_store %arg5[%c0_6, %c0_7], %11 {strides = array<i32>} : memref<16x128xf32, #tpu.memory_space<vmem>>, vector<16x128xf32>,
    return
  }
  func.func @transform_0(%arg0: i32, %arg1: i32) -> (i32, i32) {
    %c0_i32 = arith.constant 0 : i32
    %c0_i32_0 = arith.constant 0 : i32
    return %arg1, %c0_i32 : i32, i32
  }
  func.func @transform_1(%arg0: i32, %arg1: i32) -> (i32, i32) {
    %c0_i32 = arith.constant 0 : i32
    %c0_i32_0 = arith.constant 0 : i32
    return %c0_i32, %arg0 : i32, i32
  }
  func.func @transform_2(%arg0: i32, %arg1: i32) -> (i32, i32) {
    %c0_i32 = arith.constant 0 : i32
    %c0_i32_0 = arith.constant 0 : i32
    return %c0_i32, %arg0 : i32, i32
  }
  func.func @transform_3(%arg0: i32, %arg1: i32) -> (i32, i32) {
    %c0_i32 = arith.constant 0 : i32
    return %arg1, %arg0 : i32, i32
  }
}

</mosaic_0001>

<llo_original>
// kernel: tpu_custom_call.1
$region0: #{tpu_custom_call.1}
  #allocation0 [shape = 'u32[]', space=smem, size = 0x4, offset = 0x4, fixed_abs, tag = 'smem constant byte address 0x4 - core index']
  #allocation1 [shape = 'u32[144,128]{1,0:T(1,128)}', space=vmem, size = 0x12000, scoped, tag = 'internal scratch']
  %s0 = inlined_call_operand.hbm [shape: bf16[16,256], index: 0, kind: input, shape index: {}]
  %s1 = inlined_call_operand.hbm [shape: bf16[256,256], index: 1, kind: input, shape index: {}]
  %s2 = inlined_call_operand.vmem [shape: f32[1,256], index: 2, kind: input, shape index: {}]
  %s3 = inlined_call_operand.hbm [shape: f32[16,256], index: 3, kind: output, shape index: {}]
  %s4 = sld [smem:[#allocation0]]
  $region53: #{tpu_custom_call.1} parent=0
    _
  %s6 = ssub.s32 1, %s4
  %s7 = scalar_select 0, %s6, %s4
  $region1: #{tpu_custom_call.1} parent=0
    #allocation2 [shape = 'u8[8192]{0}', space=vmem, size = 0x2000, scoped, tag = 'input window, operand 0, single buffered']
    #allocation3 [shape = 's32[2]{0}', space=sflag, size = 0x8, scoped, tag = 'scoped memory for tpu_custom_call.1']
    #allocation4 [shape = 's32[2]{0}', space=sflag, size = 0x8, scoped, tag = 'scoped memory for tpu_custom_call.1']
    #allocation5 [shape = 'u8[131072]{0}', space=vmem, size = 0x20000, scoped, tag = 'input window, operand 1']
    #allocation6 [shape = 's32[2]{0}', space=sflag, size = 0x8, scoped, tag = 'scoped memory for tpu_custom_call.1']
    #allocation7 [shape = 'u8[16384]{0}', space=vmem, size = 0x4000, scoped, tag = 'output window, operand 0']
    %8 = vsyncpa [#allocation3], 0
    %9 = vsyncpa [#allocation6], 0
    %s10 = scalar_lea.sflag [#allocation6], 1
    %11 = vsyncpa %s10, 0
    %12 = vsyncpa [#allocation4], 0
    %s13 = scalar_lea.sflag [#allocation4], 1
    %14 = vsyncpa %s13, 0
    loop: start=0, step=1, limit=4
    $region2: #{tpu_custom_call.1} parent=1 // loop_pre_header
      _
    $region3: #{tpu_custom_call.1} parent=1 // loop_header
      %s16 = sphi 0, %s20
      %p17 = scmp.ge.s32.totalorder %s16, 4
      %s23 = sphi 0, %s35
      %s24 = sphi 0, %s31
      %s25 = sphi 0, %s23
      %s26 = sphi 0, %s24
      %s27 = sphi 0, %s25
      %s28 = sphi 0, %s26
      %s38 = sphi 0, %s40
      %s41 = sphi 0, %s38
      %s42 = sphi 0, %s41
      %s58 = sphi 0, %s42
      %s64 = sphi 0, %s66
      %s67 = sphi 0, %s64
      %s68 = sphi 0, %s67
      %s84 = sphi 0, %s68
      %s90 = sphi 0, %s92
      %s93 = sphi 0, %s90
      %s94 = sphi 0, %s93
      %s110 = sphi 0, %s94
      %s118 = sphi 0, %s120
      %s121 = sphi 0, %s118
      %s122 = sphi 0, %s121
      %s138 = sphi 0, %s122
    $region4: #{tpu_custom_call.1} parent=1 // loop_header_branch
      %19 = sbr.rel (%p17) target = $region8
    $region5: #{tpu_custom_call.1} parent=1 // loop_body
      %s21 = ssub.s32 %s16, 1
      %s22 = ssub.s32 %s16, 2
      %s29 = sadd.s32 1, %s24
      %p30 = scmp.ge.s32.totalorder %s29, 1
      %s31 = scalar_select %p30, 0, %s29
      %s32 = sadd.s32 1, %s23
      %s33 = scalar_select %p30, %s32, %s23
      %p34 = scmp.ge.s32.totalorder %s33, 2
      %s35 = scalar_select %p34, 0, %s33
      %s36 = ssub.s32 %s24, %s31
      %p37 = scmp.eq.s32.totalorder %s36, 0
      %s39 = sadd.s32 %s38, 1
      %s40 = scalar_select %p37, %s38, %s39
      %p43 = pneg %p37
      %p44 = scmp.eq.s32.totalorder %s16, 1
      %p45 = por %p43, %p44
      %p46 = scmp.ne.s32.totalorder %s38, %s41
      %p47 = scmp.eq.s32.totalorder %s16, 0
      %p48 = por %p46, %p47
      %p49 = scmp.ne.s32.totalorder %s38, %s41
      %p50 = scmp.eq.s32.totalorder %s21, 1
      %p51 = por %p49, %p50
      %p52 = scmp.ne.s32.totalorder %s41, %s42
      %p53 = scmp.eq.s32.totalorder %s21, 0
      %p54 = por %p52, %p53
      %p55 = scmp.ne.s32.totalorder %s41, %s42
      %p56 = scmp.eq.s32.totalorder %s22, 1
      %p57 = por %p55, %p56
      %p59 = scmp.ne.s32.totalorder %s42, %s58
      %p60 = scmp.eq.s32.totalorder %s22, 0
      %p61 = por %p59, %p60
      %s62 = ssub.s32 %s23, %s35
      %p63 = scmp.eq.s32.totalorder %s62, 0
      %s65 = sadd.s32 %s64, 1
      %s66 = scalar_select %p63, %s64, %s65
      %p69 = pneg %p63
      %p70 = scmp.eq.s32.totalorder %s16, 1
      %p71 = por %p69, %p70
      %p72 = scmp.ne.s32.totalorder %s64, %s67
      %p73 = scmp.eq.s32.totalorder %s16, 0
      %p74 = por %p72, %p73
      %p75 = scmp.ne.s32.totalorder %s64, %s67
      %p76 = scmp.eq.s32.totalorder %s21, 1
      %p77 = por %p75, %p76
      %p78 = scmp.ne.s32.totalorder %s67, %s68
      %p79 = scmp.eq.s32.totalorder %s21, 0
      %p80 = por %p78, %p79
      %p81 = scmp.ne.s32.totalorder %s67, %s68
      %p82 = scmp.eq.s32.totalorder %s22, 1
      %p83 = por %p81, %p82
      %p85 = scmp.ne.s32.totalorder %s68, %s84
      %p86 = scmp.eq.s32.totalorder %s22, 0
      %p87 = por %p85, %p86
      %s88 = ssub.s32 %s23, %s35
      %p89 = scmp.eq.s32.totalorder %s88, 0
      %s91 = sadd.s32 %s90, 1
      %s92 = scalar_select %p89, %s90, %s91
      %p95 = pneg %p89
      %p96 = scmp.eq.s32.totalorder %s16, 1
      %p97 = por %p95, %p96
      %p98 = scmp.ne.s32.totalorder %s90, %s93
      %p99 = scmp.eq.s32.totalorder %s16, 0
      %p100 = por %p98, %p99
      %p101 = scmp.ne.s32.totalorder %s90, %s93
      %p102 = scmp.eq.s32.totalorder %s21, 1
      %p103 = por %p101, %p102
      %p104 = scmp.ne.s32.totalorder %s93, %s94
      %p105 = scmp.eq.s32.totalorder %s21, 0
      %p106 = por %p104, %p105
      %p107 = scmp.ne.s32.totalorder %s93, %s94
      %p108 = scmp.eq.s32.totalorder %s22, 1
      %p109 = por %p107, %p108
      %p111 = scmp.ne.s32.totalorder %s94, %s110
      %p112 = scmp.eq.s32.totalorder %s22, 0
      %p113 = por %p111, %p112
      %s114 = ssub.s32 %s24, %s31
      %s115 = ssub.s32 %s23, %s35
      %s116 = sor.u32 %s114, %s115
      %p117 = scmp.eq.s32.totalorder %s116, 0
      %s119 = sadd.s32 %s118, 1
      %s120 = scalar_select %p117, %s118, %s119
      %p123 = pneg %p117
      %p124 = scmp.eq.s32.totalorder %s16, 1
      %p125 = por %p123, %p124
      %p126 = scmp.ne.s32.totalorder %s118, %s121
      %p127 = scmp.eq.s32.totalorder %s16, 0
      %p128 = por %p126, %p127
      %p129 = scmp.ne.s32.totalorder %s118, %s121
      %p130 = scmp.eq.s32.totalorder %s21, 1
      %p131 = por %p129, %p130
      %p132 = scmp.ne.s32.totalorder %s121, %s122
      %p133 = scmp.eq.s32.totalorder %s21, 0
      %p134 = por %p132, %p133
      %p135 = scmp.ne.s32.totalorder %s121, %s122
      %p136 = scmp.eq.s32.totalorder %s22, 1
      %p137 = por %p135, %p136
      %p139 = scmp.ne.s32.totalorder %s122, %s138
      %p140 = scmp.eq.s32.totalorder %s22, 0
      %p141 = por %p139, %p140
      %p142 = scmp.le.s32.totalorder 1, %s16
      %p143 = scmp.lt.s32.totalorder %s16, 3
      %p144 = pnand %p142, %p143
      %p145 = pneg %p144
      // Predicated region
      $region9: #{tpu_custom_call.1} parent=5 // pred_check
        _
      $region10: #{tpu_custom_call.1} parent=5 // pred_check_branch
        %147 = sbr.rel (%p144) target = $region12
      $region11: #{tpu_custom_call.1} parent=5 // pred_region
        %s148 = ssub.s32 %s16, 1
        // Predicated region
        $region13: #{tpu_custom_call.1} parent=11 // pred_check
          %p149 = pneg %p54
        $region14: #{tpu_custom_call.1} parent=11 // pred_check_branch
          %151 = sbr.rel (%p149) target = $region16
        $region15: #{tpu_custom_call.1} parent=11 // pred_region
          %s152 = smul.u32 2, %s26
          %s154 = ssub.s32 256, 256
          %155 = vsyncadd [#allocation3], %s154
          %s156 = smul.addr %s152, 2
          %s157 = smul.addr %s156, 64
          %s158 = scalar_lea.hbm %s0, %s157
          %s159 = sshll.u32 [#allocation2], 4
          %s160 = int_to_ptr.vmem [resolvable:$true] %s159
          %165 = dma.hbm_to_vmem [thread:$0]  %s158, 256, %s160, [#allocation3], 128, 128, 8
        $region16: #{tpu_custom_call.1} parent=11 // pred_fallthru
          _
      $region12: #{tpu_custom_call.1} parent=5 // pred_fallthru
        _
      %p166 = scmp.lt.s32.totalorder %s16, 2
      // Predicated region
      $region17: #{tpu_custom_call.1} parent=5 // pred_check
        %p167 = pneg %p166
      $region18: #{tpu_custom_call.1} parent=5 // pred_check_branch
        %169 = sbr.rel (%p167) target = $region20
      $region19: #{tpu_custom_call.1} parent=5 // pred_region
        // Predicated region
        $region21: #{tpu_custom_call.1} parent=19 // pred_check
          %p170 = pneg %p74
        $region22: #{tpu_custom_call.1} parent=19 // pred_check_branch
          %172 = sbr.rel (%p170) target = $region24
        $region23: #{tpu_custom_call.1} parent=19 // pred_region
          %s173 = sand.u32 %s64, 1
          %s174 = scalar_lea.sflag [#allocation6], %s173
          %s175 = sand.u32 %s64, 1
          %s176 = smul.addr %s175, 128
          %s177 = scalar_lea.vmem [#allocation5], %s176
          %s179 = ssub.s32 2048, 2048
          %180 = vsyncadd %s174, %s179
          %s181 = smul.addr %s23, 64
          %s182 = scalar_lea.hbm %s1, %s181
          %s183 = sshll.u32 %s177, 4
          %s184 = int_to_ptr.vmem [resolvable:$true] %s183
          %189 = dma.hbm_to_vmem [thread:$0]  %s182, 2048, %s184, %s174, 128, 64, 4
        $region24: #{tpu_custom_call.1} parent=19 // pred_fallthru
          _
        // Predicated region
        $region25: #{tpu_custom_call.1} parent=19 // pred_check
          %p190 = pneg %p100
        $region26: #{tpu_custom_call.1} parent=19 // pred_check_branch
          %192 = sbr.rel (%p190) target = $region28
        $region27: #{tpu_custom_call.1} parent=19 // pred_region
          %p193 = scmp.lt.s32.totalorder %s23, 1
          %s194 = scalar_select %p193, %s23, 1
          %s195 = scalar_lea.vmem %s2, %s194
        $region28: #{tpu_custom_call.1} parent=19 // pred_fallthru
          _
      $region20: #{tpu_custom_call.1} parent=5 // pred_fallthru
        _
      %p196 = scmp.le.s32.totalorder 1, %s16
      %p197 = scmp.lt.s32.totalorder %s16, 3
      %p198 = pnand %p196, %p197
      %p199 = pneg %p198
      // Predicated region
      $region29: #{tpu_custom_call.1} parent=5 // pred_check
        _
      $region30: #{tpu_custom_call.1} parent=5 // pred_check_branch
        %201 = sbr.rel (%p198) target = $region32
      $region31: #{tpu_custom_call.1} parent=5 // pred_region
        %s202 = ssub.s32 %s16, 1
        // Predicated region
        $region33: #{tpu_custom_call.1} parent=31 // pred_check
          %p203 = pneg %p54
        $region34: #{tpu_custom_call.1} parent=31 // pred_check_branch
          %205 = sbr.rel (%p203) target = $region36
        $region35: #{tpu_custom_call.1} parent=31 // pred_region
          %206 = dma.done [#allocation3], 256
        $region36: #{tpu_custom_call.1} parent=31 // pred_fallthru
          _
        %s207 = sand.u32 %s67, 1
        %s208 = scalar_lea.sflag [#allocation6], %s207
        %s209 = sand.u32 %s67, 1
        %s210 = smul.addr %s209, 128
        %s211 = scalar_lea.vmem [#allocation5], %s210
        // Predicated region
        $region37: #{tpu_custom_call.1} parent=31 // pred_check
          %p212 = pneg %p80
        $region38: #{tpu_custom_call.1} parent=31 // pred_check_branch
          %214 = sbr.rel (%p212) target = $region40
        $region39: #{tpu_custom_call.1} parent=31 // pred_region
          %215 = dma.done %s208, 2048
        $region40: #{tpu_custom_call.1} parent=31 // pred_fallthru
          _
        %p216 = pneg %p54
        %p217 = pneg %p51
        %s218 = sand.u32 %s67, 1
        %s219 = scalar_lea.sflag [#allocation6], %s218
        %s220 = sand.u32 %s67, 1
        %s221 = smul.addr %s220, 128
        %s222 = scalar_lea.vmem [#allocation5], %s221
        %p223 = pneg %p80
        %p224 = pneg %p77
        %p225 = scmp.lt.s32.totalorder %s25, 1
        %s226 = scalar_select %p225, %s25, 1
        %s227 = scalar_lea.vmem %s2, %s226
        %p228 = pneg %p106
        %p229 = pneg %p103
        %p230 = pneg %p134
        %p231 = pneg %p131
        %s232 = sand.u32 %s121, 1
        %s233 = scalar_lea.sflag [#allocation4], %s232
        %s234 = sand.u32 %s121, 1
        %s235 = smul.addr %s234, 16
        %s236 = scalar_lea.vmem [#allocation7], %s235
        %s237 = smul.u32 2, %s26
        %p238 = scmp.lt.s32.totalorder %s25, 1
        %s239 = scalar_select %p238, %s25, 1
        %s240 = scalar_lea.vmem %s2, %s239
        %s241 = smul.u32 2, %s26
        %v243 = vld [vmem:[#allocation2] sm:$0xff]
        %v244 = vld [vmem:[#allocation2 + $0x8] sm:$0xff]
        %v245 = vld [vmem:[%s211] sm:$0xf]
        %v246 = vld [vmem:[%s211 + $0x4] sm:$0xf]
        %v247 = vld [vmem:[%s211 + $0x8] sm:$0xf]
        %v248 = vld [vmem:[%s211 + $0xc] sm:$0xf]
        %v249 = vld [vmem:[%s211 + $0x10] sm:$0xf]
        %v250 = vld [vmem:[%s211 + $0x14] sm:$0xf]
        %v251 = vld [vmem:[%s211 + $0x18] sm:$0xf]
        %v252 = vld [vmem:[%s211 + $0x1c] sm:$0xf]
        %v253 = vld [vmem:[%s211 + $0x20] sm:$0xf]
        %v254 = vld [vmem:[%s211 + $0x24] sm:$0xf]
        %v255 = vld [vmem:[%s211 + $0x28] sm:$0xf]
        %v256 = vld [vmem:[%s211 + $0x2c] sm:$0xf]
        %v257 = vld [vmem:[%s211 + $0x30] sm:$0xf]
        %v258 = vld [vmem:[%s211 + $0x34] sm:$0xf]
        %v259 = vld [vmem:[%s211 + $0x38] sm:$0xf]
        %v260 = vld [vmem:[%s211 + $0x3c] sm:$0xf]
        %v261 = vld [vmem:[%s211 + $0x40] sm:$0xf]
        %v262 = vld [vmem:[%s211 + $0x44] sm:$0xf]
        %v263 = vld [vmem:[%s211 + $0x48] sm:$0xf]
        %v264 = vld [vmem:[%s211 + $0x4c] sm:$0xf]
        %v265 = vld [vmem:[%s211 + $0x50] sm:$0xf]
        %v266 = vld [vmem:[%s211 + $0x54] sm:$0xf]
        %v267 = vld [vmem:[%s211 + $0x58] sm:$0xf]
        %v268 = vld [vmem:[%s211 + $0x5c] sm:$0xf]
        %v269 = vld [vmem:[%s211 + $0x60] sm:$0xf]
        %v270 = vld [vmem:[%s211 + $0x64] sm:$0xf]
        %v271 = vld [vmem:[%s211 + $0x68] sm:$0xf]
        %v272 = vld [vmem:[%s211 + $0x6c] sm:$0xf]
        %v273 = vld [vmem:[%s211 + $0x70] sm:$0xf]
        %v274 = vld [vmem:[%s211 + $0x74] sm:$0xf]
        %v275 = vld [vmem:[%s211 + $0x78] sm:$0xf]
        %v276 = vld [vmem:[%s211 + $0x7c] sm:$0xf]
        %v279 = vunpack.c.l.b16 %v243
        %v280 = vunpack.c.h.b16 %v243
        %v281 = vunpack.c.l.b16 %v244
        %v282 = vunpack.c.h.b16 %v244
        %v283 = vpack.c.b16 %v281, %v279
        %v284 = vpack.c.b16 %v282, %v280
        %v319 = vunpack.c.l.b16 %v245
        %v320 = vunpack.c.l.b16 %v246
        %v321 = vunpack.c.l.b16 %v247
        %v322 = vunpack.c.l.b16 %v248
        %v323 = vunpack.c.l.b16 %v249
        %v324 = vunpack.c.l.b16 %v250
        %v325 = vunpack.c.l.b16 %v251
        %v326 = vunpack.c.l.b16 %v252
        %v327 = vunpack.c.l.b16 %v253
        %v328 = vunpack.c.l.b16 %v254
        %v329 = vunpack.c.l.b16 %v255
        %v330 = vunpack.c.l.b16 %v256
        %v331 = vunpack.c.l.b16 %v257
        %v332 = vunpack.c.l.b16 %v258
        %v333 = vunpack.c.l.b16 %v259
        %v334 = vunpack.c.l.b16 %v260
        %v335 = vunpack.c.l.b16 %v261
        %v336 = vunpack.c.l.b16 %v262
        %v337 = vunpack.c.l.b16 %v263
        %v338 = vunpack.c.l.b16 %v264
        %v339 = vunpack.c.l.b16 %v265
        %v340 = vunpack.c.l.b16 %v266
        %v341 = vunpack.c.l.b16 %v267
        %v342 = vunpack.c.l.b16 %v268
        %v343 = vunpack.c.l.b16 %v269
        %v344 = vunpack.c.l.b16 %v270
        %v345 = vunpack.c.l.b16 %v271
        %v346 = vunpack.c.l.b16 %v272
        %v347 = vunpack.c.l.b16 %v273
        %v348 = vunpack.c.l.b16 %v274
        %v349 = vunpack.c.l.b16 %v275
        %v350 = vunpack.c.l.b16 %v276
        %v351 = vpack.c.b16 %v320, %v319
        %v352 = vpack.c.b16 %v322, %v321
        %v353 = vpack.c.b16 %v324, %v323
        %v354 = vpack.c.b16 %v326, %v325
        %v355 = vpack.c.b16 %v328, %v327
        %v356 = vpack.c.b16 %v330, %v329
        %v357 = vpack.c.b16 %v332, %v331
        %v358 = vpack.c.b16 %v334, %v333
        %v359 = vpack.c.b16 %v336, %v335
        %v360 = vpack.c.b16 %v338, %v337
        %v361 = vpack.c.b16 %v340, %v339
        %v362 = vpack.c.b16 %v342, %v341
        %v363 = vpack.c.b16 %v344, %v343
        %v364 = vpack.c.b16 %v346, %v345
        %v365 = vpack.c.b16 %v348, %v347
        %v366 = vpack.c.b16 %v350, %v349
        %383 = vmatprep.subr.bf16.mxu0 0
        %384 = vmatpush1.bf16.msra.mxu0 %v351
        %385 = vmatprep.subr.bf16.mxu0 0
        %386 = vmatpush1.bf16.msra.mxu0 %v352
        %387 = vmatprep.subr.bf16.mxu0 0
        %388 = vmatpush1.bf16.msra.mxu0 %v353
        %389 = vmatprep.subr.bf16.mxu0 0
        %390 = vmatpush1.bf16.msra.mxu0 %v354
        %391 = vmatprep.subr.bf16.mxu0 0
        %392 = vmatpush1.bf16.msra.mxu0 %v355
        %393 = vmatprep.subr.bf16.mxu0 0
        %394 = vmatpush1.bf16.msra.mxu0 %v356
        %395 = vmatprep.subr.bf16.mxu0 0
        %396 = vmatpush1.bf16.msra.mxu0 %v357
        %397 = vmatprep.subr.bf16.mxu0 0
        %398 = vmatpush1.bf16.msra.mxu0 %v358
        %399 = vmatprep.subr.bf16.mxu0 0
        %400 = vmatpush1.bf16.msra.mxu0 %v359
        %401 = vmatprep.subr.bf16.mxu0 0
        %402 = vmatpush1.bf16.msra.mxu0 %v360
        %403 = vmatprep.subr.bf16.mxu0 0
        %404 = vmatpush1.bf16.msra.mxu0 %v361
        %405 = vmatprep.subr.bf16.mxu0 0
        %406 = vmatpush1.bf16.msra.mxu0 %v362
        %407 = vmatprep.subr.bf16.mxu0 0
        %408 = vmatpush1.bf16.msra.mxu0 %v363
        %409 = vmatprep.subr.bf16.mxu0 0
        %410 = vmatpush1.bf16.msra.mxu0 %v364
        %411 = vmatprep.subr.bf16.mxu0 0
        %412 = vmatpush1.bf16.msra.mxu0 %v365
        %413 = vmatprep.subr.bf16.mxu0 0
        %414 = vmatpush1.bf16.msra.mxu0 %v366
        %415 = vmatprep.mubr.bf16.mxu0 %v284
        %416 = vmatmul.mubr.bf16.gmra.mrb[0].mxu0 %v283
        %v417 = vpop.f32.mrb[0].mxu0
        %v418 = vadd.f32 0.0, %v417
        %v419 = vpop.f32.mrb[0].mxu0
        %v420 = vpop.f32.mrb[0].mxu0
        %v421 = vadd.f32 0.0, %v420
        %v422 = vpop.f32.mrb[0].mxu0
        %423 = vdwg.mxu0
        %s424 = smul.u32 %s25, 128
        %s425 = sshra.s32 %s424, 7
        %s426 = sand.u32 %s424, 127
        %s427 = smul.addr %s425, 4
        %s428 = scalar_lea.vmem [#allocation2], %s427
        %v429 = vld [vmem:[%s428] sm:$0xf]
        %v430 = vld [vmem:[%s428 + $0x8] sm:$0xf]
        %v431 = vunpack.c.l.bf16 %v429
        %v432 = vunpack.c.l.bf16 %v430
        %v433 = vld [vmem:[%s240] sm:$0x1]
        %v435 = vlaneseq
        %v436 = vshrl.u32 %v435, 7
        %v437 = vsub.s32 0, %v436
        %v438 = vrot.slane %v433, %v437
        %v440 = vmul.f32 %v431, %v438
        %v441 = vmul.f32 %v432, %v438
        %v442 = vsub.f32 %v418, %v440
        %v443 = vsub.f32 %v421, %v441
        %444 = vst [vmem:[%s236] sm:$0xff] %v442
        %445 = vst [vmem:[%s236 + $0x8] sm:$0xff] %v443
        %s446 = sand.u32 %s121, 1
        %s447 = scalar_lea.sflag [#allocation4], %s446
        %s448 = sand.u32 %s121, 1
        %s449 = smul.addr %s448, 16
        %s450 = scalar_lea.vmem [#allocation7], %s449
        // Predicated region
        $region41: #{tpu_custom_call.1} parent=31 // pred_check
          %p451 = pneg %p131
        $region42: #{tpu_custom_call.1} parent=31 // pred_check_branch
          %453 = sbr.rel (%p451) target = $region44
        $region43: #{tpu_custom_call.1} parent=31 // pred_region
          %s454 = smul.u32 2, %s26
          %s456 = ssub.s32 256, 256
          %457 = vsyncadd %s447, %s456
          %s458 = smul.addr %s454, 2
          %s459 = sadd.s32 %s25, %s458
          %s460 = smul.addr %s459, 128
          %s461 = scalar_lea.hbm %s3, %s460
          %s462 = sshll.u32 %s450, 4
          %s463 = int_to_ptr.vmem [resolvable:$true] %s462
          %468 = dma.vmem_to_hbm [thread:$0]  %s463, 256, %s461, %s447, 128, 256, 8
        $region44: #{tpu_custom_call.1} parent=31 // pred_fallthru
          _
      $region32: #{tpu_custom_call.1} parent=5 // pred_fallthru
        _
      %p469 = scmp.le.s32.totalorder 2, %s16
      // Predicated region
      $region45: #{tpu_custom_call.1} parent=5 // pred_check
        %p470 = pneg %p469
      $region46: #{tpu_custom_call.1} parent=5 // pred_check_branch
        %472 = sbr.rel (%p470) target = $region48
      $region47: #{tpu_custom_call.1} parent=5 // pred_region
        %s473 = ssub.s32 %s16, 2
        // Predicated region
        $region49: #{tpu_custom_call.1} parent=47 // pred_check
          %p474 = pneg %p137
        $region50: #{tpu_custom_call.1} parent=47 // pred_check_branch
          %476 = sbr.rel (%p474) target = $region52
        $region51: #{tpu_custom_call.1} parent=47 // pred_region
          %s477 = sand.u32 %s122, 1
          %s478 = scalar_lea.sflag [#allocation4], %s477
          %s479 = sand.u32 %s122, 1
          %s480 = smul.addr %s479, 16
          %s481 = scalar_lea.vmem [#allocation7], %s480
          %482 = dma.done %s478, 256
        $region52: #{tpu_custom_call.1} parent=47 // pred_fallthru
          _
      $region48: #{tpu_custom_call.1} parent=5 // pred_fallthru
        _
    $region6: #{tpu_custom_call.1} parent=1 // loop_footer
      %s20 = sadd.s32 1, %s16
    $region7: #{tpu_custom_call.1} parent=1 // loop_footer_branch
      %15 = sbr.rel target = $region3
    $region8: #{tpu_custom_call.1} parent=1 // loop_exit
      _
    %483 = vsyncpa [#allocation3], 1
    %s484 = scalar_lea.sflag [#allocation3], 1
    %485 = vsyncpa %s484, 1
    %486 = vsyncpa [#allocation6], 1
    %s487 = scalar_lea.sflag [#allocation6], 1
    %488 = vsyncpa %s487, 1
    %489 = vsyncpa [#allocation4], 1
    %s490 = scalar_lea.sflag [#allocation4], 1
    %491 = vsyncpa %s490, 1

</llo_original>
